<compile_context>
chip_gen: v7x
topology: tpu7x:2x2x1
jax: 0.10.0
libtpu: 0.0.40
codegen_flags: <defaults>
</compile_context>

<pallas_src>
import math

import jax
import jax.numpy as jnp
from jax.experimental import pallas as pl
from jax.experimental.pallas import tpu as pltpu

_LANES = 128
# 2048 rows x 128 lanes x 4 B = 1 MiB per f32 output buffer (x2 double-buffer):
# comfortably inside the scoped VMEM default on v5e/v6e (32 MiB) and v7x (32 MiB
# of 64 MiB physical).
_MAX_TILE_ROWS = 2048


def _fill_kernel(value_ref, o_ref):
    # Output-only fill: the store is the only work (no input load, no VPU mul).
    o_ref[...] = jnp.full(o_ref.shape, value_ref[0], dtype=o_ref.dtype)


def mock_prob_model_forward(x, value):
    """Returns (value * ones_like(x), None), matching MockProbModel.forward."""
    total = math.prod(x.shape)
    rows = pl.cdiv(total, _LANES)

    if rows <= _MAX_TILE_ROWS:
        # Single block covering the whole (sublane-padded) output.
        tile_rows = max(8, ((rows + 7) // 8) * 8)
    else:
        # Large tiles so per-grid-step overhead (~0.35 us) is negligible;
        # tile_rows is a multiple of 32, satisfying bf16/int8 sublane minimums.
        tile_rows = _MAX_TILE_ROWS
    padded_rows = pl.cdiv(rows, tile_rows) * tile_rows
    grid = (padded_rows // tile_rows,)

    out2 = pl.pallas_call(
        _fill_kernel,
        out_shape=jax.ShapeDtypeStruct((padded_rows, _LANES), x.dtype),
        grid=grid,
        in_specs=[
            # Scalar value only; x itself is never passed to / read by the kernel.
            pl.BlockSpec(memory_space=pltpu.MemorySpace.SMEM),
        ],
        out_specs=pl.BlockSpec((tile_rows, _LANES), lambda i: (i, 0)),
        compiler_params=pltpu.CompilerParams(
            dimension_semantics=("parallel",),  # lets v7x shard the grid across its 2 TCs
        ),
    )(jnp.array([value], dtype=x.dtype))

    # Undo lane-dense layout: drop padding (no-op when total % 128 == 0) and
    # restore x's shape. x's data is never touched.
    out = out2.reshape(-1)[:total].reshape(x.shape)
    return out, None


if __name__ == "__main__":
    key = jax.random.PRNGKey(0)
    # Small shapes consistent with an image-like input.
    x = jax.random.normal(key, (2, 4, 16, 16), dtype=jnp.float32)

    # Deterministic "self.value" (set externally in the original test harness).
    value = 0.5
    # Unused parameter from __init__ (kept for fidelity with the module).
    p = jnp.ones((1,), dtype=jnp.float32)  # nn.Parameter(torch.ones(1)), unused in forward

    out, aux = mock_prob_model_forward(x, value)
    out = jax.block_until_ready(out)

    expected = value * jnp.ones_like(x)
    assert aux is None
    assert out.shape == x.shape and out.dtype == x.dtype
    assert jnp.allclose(out, expected)

    print("KERNEL_OK")
</pallas_src>

<mosaic_0001>
module attributes {stable_mosaic.version = 11 : i64} {
  func.func @_fill_kernel(%arg0: i32, %arg1: memref<1xf32, #tpu.memory_space<smem>>, %arg2: memref<16x128xf32, #tpu.memory_space<vmem>>) attributes {dimension_semantics = [#tpu.dimension_semantics<parallel>], iteration_bounds = array<i64: 1>, scalar_prefetch = 0 : i64, scratch_operands = 0 : i64, tpu.core_type = #tpu.core_type<tc>, window_params = [{transform_indices = @transform_0, window_bounds = array<i64: 1>}, {transform_indices = @transform_1, window_bounds = array<i64: 16, 128>}]} {
    %c0 = arith.constant 0 : index
    %0 = memref.load %arg1[%c0] : memref<1xf32, #tpu.memory_space<smem>>
    %1 = vector.broadcast %0 : f32 to vector<16x128xf32>
    %c0_0 = arith.constant 0 : index
    %c0_1 = arith.constant 0 : index
    %2 = vector.load %arg2[%c0_0, %c0_1] : memref<16x128xf32, #tpu.memory_space<vmem>>, vector<16x128xf32>
    tpu.vector_store %arg2[%c0_0, %c0_1], %1 {strides = array<i32>} : memref<16x128xf32, #tpu.memory_space<vmem>>, vector<16x128xf32>,
    return
  }
  func.func @transform_0(%arg0: i32) -> i32 {
    %c0_i32 = arith.constant 0 : i32
    %c0_i32_0 = arith.constant 0 : i32
    return %c0_i32 : i32
  }
  func.func @transform_1(%arg0: i32) -> (i32, i32) {
    %c0_i32 = arith.constant 0 : i32
    %c0_i32_0 = arith.constant 0 : i32
    return %arg0, %c0_i32 : i32, i32
  }
}

</mosaic_0001>

<llo_original>
// kernel: tpu_custom_call.1
$region0: #{tpu_custom_call.1}
  #allocation0 [shape = 'u32[]', space=smem, size = 0x4, offset = 0x4, fixed_abs, tag = 'smem constant byte address 0x4 - core index']
  #allocation1 [shape = 'u32[144,128]{1,0:T(1,128)}', space=vmem, size = 0x12000, scoped, tag = 'internal scratch']
  #allocation2 [shape = 'f32[1]{0:T(128)S(6)}', space=smem, size = 0x200, scoped, tag = 'scoped memory for tpu_custom_call.1']
  %s0 = inlined_call_operand.<no memory space> [shape: f32[1], index: 0, kind: input, shape index: {}]
  %s1 = inlined_call_operand.hbm [shape: f32[16,128], index: 1, kind: output, shape index: {}]
  %s2 = sld [smem:[#allocation0]]
  $region14: #{tpu_custom_call.1} parent=0
    _
  %s4 = ssub.s32 1, %s2
  %s5 = scalar_select 0, %s4, %s2
  %6 = sst [smem:[#allocation2]] %s0
  $region1: #{tpu_custom_call.1} parent=0
    #allocation3 [shape = 'u8[8192]{0}', space=vmem, size = 0x2000, scoped, tag = 'output window, operand 0, single buffered']
    #allocation4 [shape = 's32[1]{0}', space=sflag, size = 0x4, scoped, tag = 'scoped memory for tpu_custom_call.1']
    %7 = vsyncpa [#allocation4], 0
    // Predicated region
    $region2: #{tpu_custom_call.1} parent=1 // pred_check
      _
    $region3: #{tpu_custom_call.1} parent=1 // pred_check_branch
      %9 = sbr.rel (0) target = $region5
    $region4: #{tpu_custom_call.1} parent=1 // pred_region
      _
    $region5: #{tpu_custom_call.1} parent=1 // pred_fallthru
      _
    %s10 = sld [smem:[#allocation2]]
    %v11 = vstv %s10
    %12 = vst [vmem:[#allocation3] sm:$0xff] %v11
    %13 = vst [vmem:[#allocation3 + $0x8] sm:$0xff] %v11
    // Predicated region
    $region6: #{tpu_custom_call.1} parent=1 // pred_check
      _
    $region7: #{tpu_custom_call.1} parent=1 // pred_check_branch
      %15 = sbr.rel (0) target = $region9
    $region8: #{tpu_custom_call.1} parent=1 // pred_region
      %s17 = ssub.s32 256, 256
      %18 = vsyncadd [#allocation4], %s17
      %s19 = sshll.u32 [#allocation3], 4
      %s20 = int_to_ptr.vmem [resolvable:$true] %s19
      %25 = dma.vmem_to_hbm [thread:$0]  %s20, 256, %s1, [#allocation4], 128, 128, 8
    $region9: #{tpu_custom_call.1} parent=1 // pred_fallthru
      _
    // Predicated region
    $region10: #{tpu_custom_call.1} parent=1 // pred_check
      _
    $region11: #{tpu_custom_call.1} parent=1 // pred_check_branch
      %27 = sbr.rel (0) target = $region13
    $region12: #{tpu_custom_call.1} parent=1 // pred_region
      %28 = dma.done [#allocation4], 256
    $region13: #{tpu_custom_call.1} parent=1 // pred_fallthru
      _
    %29 = vsyncpa [#allocation4], 1

</llo_original>
